<compile_context>
chip_gen: v7x
topology: tpu7x:2x2x1
jax: 0.10.0
libtpu: 0.0.40
codegen_flags: <defaults>
</compile_context>

<pallas_src>
import functools

import jax
import jax.numpy as jnp
from jax.experimental import pallas as pl
from jax.experimental.pallas import tpu as pltpu

N_FEAT = 16                 # input feature dim (the `n` passed to Net(n))
HID1, HID2, OUT = 32, 4, 2  # layer widths from the PyTorch module
WPAD = 32                   # padded feature width = max(N_FEAT, HID1, HID2, OUT)
NEG_BIG = -1e30             # finite "-inf" for masking padded softmax columns


# ----------------------------- Pallas kernel --------------------------------
def _fused_gcn_kernel(a_ref, x_ref, w_ref, b_ref, x_out_ref, y_out_ref, *,
                      n_cls):
    """All four GCNConv layers + tanh + masked log_softmax fused in VMEM."""
    a = a_ref[...]                                    # (N, N) f32, loaded once

    def layer(h, i):
        # GCNConv order: linear first (H @ W), then propagate A_hat @ (HW) + b.
        hw = jnp.dot(h, w_ref[i], preferred_element_type=jnp.float32)
        return jnp.dot(a, hw, preferred_element_type=jnp.float32) + b_ref[i]

    h = x_ref[...]                                    # (N, WPAD)
    h = jnp.tanh(layer(h, 0))                         # conv1
    h = jnp.tanh(layer(h, 1))                         # conv2
    h = jnp.tanh(layer(h, 2))                         # conv3
    # Real columns = OUT; padded columns stay exactly 0 (zero-padded W/b,
    # tanh(0) = 0), so this store is safe to slice on the host side.
    x_out_ref[...] = h

    y = layer(h, 3)                                   # conv4
    # log_softmax over dim=1, restricted to the real (unpadded) columns.
    col = jax.lax.broadcasted_iota(jnp.int32, y.shape, 1)
    valid = col < n_cls
    y = jnp.where(valid, y, NEG_BIG)
    m = jnp.max(y, axis=1, keepdims=True)
    s = y - m
    e = jnp.where(valid, jnp.exp(s), 0.0)
    lse = jnp.log(jnp.sum(e, axis=1, keepdims=True))
    # NOTE: padded cols of y_out hold ~NEG_BIG; callers must slice [:, :n_cls].
    y_out_ref[...] = s - lse


# ------------------------------ glue (JAX) -----------------------------------
def net_forward(a_hat, x_pad, w_stack, b_stack):
    """x_pad: (N, WPAD) zero-padded features; w_stack/b_stack from pack_weights."""
    n = x_pad.shape[0]

    # Cost hint from REAL (unpadded) dims so XLA schedules the call sensibly.
    dims = [(N_FEAT, HID1), (HID1, HID2), (HID2, OUT), (OUT, HID2)]
    flops = sum(2 * n * fi * fo + 2 * n * n * fo for fi, fo in dims)
    transcendentals = n * (HID1 + HID2 + OUT) + 2 * n * HID2   # tanh x3, exp, log
    bytes_accessed = 4 * (n * n + n * N_FEAT
                          + sum(fi * fo + fo for fi, fo in dims)
                          + n * (OUT + HID2))

    vmem = pl.BlockSpec(memory_space=pltpu.MemorySpace.VMEM)
    x_pad_out, y_pad_out = pl.pallas_call(
        functools.partial(_fused_gcn_kernel, n_cls=HID2),
        out_shape=(jax.ShapeDtypeStruct((n, WPAD), jnp.float32),
                   jax.ShapeDtypeStruct((n, WPAD), jnp.float32)),
        in_specs=[vmem] * 4,
        out_specs=(vmem, vmem),
        cost_estimate=pl.CostEstimate(flops=flops,
                                      transcendentals=transcendentals,
                                      bytes_accessed=bytes_accessed),
    )(a_hat, x_pad, w_stack, b_stack)

    # Slice back to the real feature widths (matches the PyTorch return shapes).
    return x_pad_out[:, :OUT], y_pad_out[:, :HID2]


def pack_weights(params):
    """One-time packing: zero-pad each W_i/b_i to WPAD and stack them."""
    w = jnp.zeros((4, WPAD, WPAD), jnp.float32)
    b = jnp.zeros((4, 1, WPAD), jnp.float32)
    for i in range(4):
        wi = params[f"w{i + 1}"]
        bi = params[f"b{i + 1}"]
        w = w.at[i, :wi.shape[0], :wi.shape[1]].set(wi)
        b = b.at[i, 0, :bi.shape[0]].set(bi)
    return w, b


def pack_features(x):
    """One-time packing: zero-pad features from (N, F) to (N, WPAD)."""
    n, f = x.shape
    return jnp.pad(x.astype(jnp.float32), ((0, 0), (0, WPAD - f)))


def net_forward_ref(a_hat, x, params):
    """Pure-JAX reference of the same forward pass (for parity checking)."""
    h = x
    for i in range(1, 4):
        h = jnp.tanh(a_hat @ (h @ params[f"w{i}"]) + params[f"b{i}"])
    y = a_hat @ (h @ params["w4"]) + params["b4"]
    return h, jax.nn.log_softmax(y, axis=1)


def build_norm_adj(edge_index, num_nodes):
    """Dense D^{-1/2} (A + I) D^{-1/2} from an (undirected) edge_index."""
    src, dst = edge_index
    a = jnp.zeros((num_nodes, num_nodes), jnp.float32)
    a = a.at[src, dst].set(1.0)
    a = a.at[dst, src].set(1.0)                      # undirected
    a = a + jnp.eye(num_nodes, dtype=jnp.float32)    # self loops
    deg = jnp.sum(a, axis=1)
    d_inv_sqrt = jnp.where(deg > 0, 1.0 / jnp.sqrt(deg), 0.0)
    return (d_inv_sqrt[:, None] * a) * d_inv_sqrt[None, :]


def glorot(key, shape):
    fan_in, fan_out = shape
    limit = jnp.sqrt(6.0 / (fan_in + fan_out))
    return jax.random.uniform(key, shape, jnp.float32, -limit, limit)


def init_params(key, n_in):
    dims = [(n_in, HID1), (HID1, HID2), (HID2, OUT), (OUT, HID2)]
    params = {}
    keys = jax.random.split(key, len(dims))
    for i, (k, (fi, fo)) in enumerate(zip(keys, dims), start=1):
        params[f"w{i}"] = glorot(k, (fi, fo))
        params[f"b{i}"] = jnp.zeros((fo,), jnp.float32)
    return params


# --------------------------------- main ---------------------------------------
if __name__ == "__main__":
    key = jax.random.PRNGKey(0)
    N_NODES = 16          # number of graph nodes

    # Deterministic scale-free-ish graph: a ring plus a hub (node 0).
    ring_src = jnp.arange(N_NODES, dtype=jnp.int32)
    ring_dst = (ring_src + 1) % N_NODES
    hub_src = jnp.zeros((N_NODES - 1,), dtype=jnp.int32)
    hub_dst = jnp.arange(1, N_NODES, dtype=jnp.int32)
    edge_index = (jnp.concatenate([ring_src, hub_src]),
                  jnp.concatenate([ring_dst, hub_dst]))

    k_feat, k_param = jax.random.split(key)
    feature = jax.random.normal(k_feat, (N_NODES, N_FEAT), jnp.float32)
    a_hat = build_norm_adj(edge_index, N_NODES)
    params = init_params(k_param, N_FEAT)

    # One-time packing (outside the per-call jit): pad + stack weights / X.
    w_stack, b_stack = pack_weights(params)
    x_pad = pack_features(feature)

    fwd = jax.jit(net_forward)
    x_out, y_out = fwd(a_hat, x_pad, w_stack, b_stack)
    jax.block_until_ready((x_out, y_out))

    assert x_out.shape == (N_NODES, OUT)
    assert y_out.shape == (N_NODES, HID2)
    # Parity with the pure-JAX reference (loose tol: MXU f32 matmul passes).
    x_ref_out, y_ref_out = net_forward_ref(a_hat, feature, params)
    assert jnp.allclose(x_out, x_ref_out, atol=3e-2), "x_out mismatch vs ref"
    assert jnp.allclose(y_out, y_ref_out, atol=3e-2), "y_out mismatch vs ref"
    # log_softmax rows should sum to 1 after exp.
    assert jnp.allclose(jnp.sum(jnp.exp(y_out), axis=1), 1.0, atol=1e-3)
    print("KERNEL_OK")
</pallas_src>

<mosaic_0001>
module attributes {stable_mosaic.version = 11 : i64} {
  func.func @_fused_gcn_kernel(%arg0: memref<16x16xf32, #tpu.memory_space<vmem>>, %arg1: memref<16x32xf32, #tpu.memory_space<vmem>>, %arg2: memref<4x32x32xf32, #tpu.memory_space<vmem>>, %arg3: memref<4x1x32xf32, #tpu.memory_space<vmem>>, %arg4: memref<16x32xf32, #tpu.memory_space<vmem>>, %arg5: memref<16x32xf32, #tpu.memory_space<vmem>>) attributes {dimension_semantics = [], scalar_prefetch = 0 : i64, scratch_operands = 0 : i64, tpu.core_type = #tpu.core_type<tc>} {
    %c0 = arith.constant 0 : index
    %c0_0 = arith.constant 0 : index
    %0 = vector.load %arg0[%c0, %c0_0] : memref<16x16xf32, #tpu.memory_space<vmem>>, vector<16x16xf32>
    %c0_1 = arith.constant 0 : index
    %c0_2 = arith.constant 0 : index
    %1 = vector.load %arg1[%c0_1, %c0_2] : memref<16x32xf32, #tpu.memory_space<vmem>>, vector<16x32xf32>
    %c0_3 = arith.constant 0 : index
    %c0_4 = arith.constant 0 : index
    %c0_5 = arith.constant 0 : index
    %2 = vector.load %arg2[%c0_3, %c0_4, %c0_5] : memref<4x32x32xf32, #tpu.memory_space<vmem>>, vector<1x32x32xf32>
    %3 = vector.shape_cast %2 : vector<1x32x32xf32> to vector<32x32xf32>
    %cst = arith.constant dense<0.000000e+00> : vector<16x32xf32>
    %4 = tpu.matmul %1, %3, %cst {dimension_numbers = #tpu.dot_dimension_numbers<[1], [0], [0], [1], [0, 0, 1, 1], [], []>} : vector<16x32xf32>, vector<32x32xf32>, vector<16x32xf32> -> vector<16x32xf32>
    %cst_6 = arith.constant dense<0.000000e+00> : vector<16x32xf32>
    %5 = tpu.matmul %0, %4, %cst_6 {dimension_numbers = #tpu.dot_dimension_numbers<[1], [0], [0], [1], [0, 0, 1, 1], [], []>} : vector<16x16xf32>, vector<16x32xf32>, vector<16x32xf32> -> vector<16x32xf32>
    %c0_7 = arith.constant 0 : index
    %c0_8 = arith.constant 0 : index
    %c0_9 = arith.constant 0 : index
    %6 = vector.load %arg3[%c0_7, %c0_8, %c0_9] : memref<4x1x32xf32, #tpu.memory_space<vmem>>, vector<1x1x32xf32>
    %7 = vector.shape_cast %6 : vector<1x1x32xf32> to vector<1x32xf32>
    %8 = vector.broadcast %7 : vector<1x32xf32> to vector<16x32xf32>
    %9 = arith.addf %5, %8 : vector<16x32xf32>
    %10 = math.tanh %9 : vector<16x32xf32>
    %c1 = arith.constant 1 : index
    %c0_10 = arith.constant 0 : index
    %c0_11 = arith.constant 0 : index
    %11 = vector.load %arg2[%c1, %c0_10, %c0_11] : memref<4x32x32xf32, #tpu.memory_space<vmem>>, vector<1x32x32xf32>
    %12 = vector.shape_cast %11 : vector<1x32x32xf32> to vector<32x32xf32>
    %cst_12 = arith.constant dense<0.000000e+00> : vector<16x32xf32>
    %13 = tpu.matmul %10, %12, %cst_12 {dimension_numbers = #tpu.dot_dimension_numbers<[1], [0], [0], [1], [0, 0, 1, 1], [], []>} : vector<16x32xf32>, vector<32x32xf32>, vector<16x32xf32> -> vector<16x32xf32>
    %cst_13 = arith.constant dense<0.000000e+00> : vector<16x32xf32>
    %14 = tpu.matmul %0, %13, %cst_13 {dimension_numbers = #tpu.dot_dimension_numbers<[1], [0], [0], [1], [0, 0, 1, 1], [], []>} : vector<16x16xf32>, vector<16x32xf32>, vector<16x32xf32> -> vector<16x32xf32>
    %c1_14 = arith.constant 1 : index
    %c0_15 = arith.constant 0 : index
    %c0_16 = arith.constant 0 : index
    %15 = vector.load %arg3[%c1_14, %c0_15, %c0_16] : memref<4x1x32xf32, #tpu.memory_space<vmem>>, vector<1x1x32xf32>
    %16 = vector.shape_cast %15 : vector<1x1x32xf32> to vector<1x32xf32>
    %17 = vector.broadcast %16 : vector<1x32xf32> to vector<16x32xf32>
    %18 = arith.addf %14, %17 : vector<16x32xf32>
    %19 = math.tanh %18 : vector<16x32xf32>
    %c2 = arith.constant 2 : index
    %c0_17 = arith.constant 0 : index
    %c0_18 = arith.constant 0 : index
    %20 = vector.load %arg2[%c2, %c0_17, %c0_18] : memref<4x32x32xf32, #tpu.memory_space<vmem>>, vector<1x32x32xf32>
    %21 = vector.shape_cast %20 : vector<1x32x32xf32> to vector<32x32xf32>
    %cst_19 = arith.constant dense<0.000000e+00> : vector<16x32xf32>
    %22 = tpu.matmul %19, %21, %cst_19 {dimension_numbers = #tpu.dot_dimension_numbers<[1], [0], [0], [1], [0, 0, 1, 1], [], []>} : vector<16x32xf32>, vector<32x32xf32>, vector<16x32xf32> -> vector<16x32xf32>
    %cst_20 = arith.constant dense<0.000000e+00> : vector<16x32xf32>
    %23 = tpu.matmul %0, %22, %cst_20 {dimension_numbers = #tpu.dot_dimension_numbers<[1], [0], [0], [1], [0, 0, 1, 1], [], []>} : vector<16x16xf32>, vector<16x32xf32>, vector<16x32xf32> -> vector<16x32xf32>
    %c2_21 = arith.constant 2 : index
    %c0_22 = arith.constant 0 : index
    %c0_23 = arith.constant 0 : index
    %24 = vector.load %arg3[%c2_21, %c0_22, %c0_23] : memref<4x1x32xf32, #tpu.memory_space<vmem>>, vector<1x1x32xf32>
    %25 = vector.shape_cast %24 : vector<1x1x32xf32> to vector<1x32xf32>
    %26 = vector.broadcast %25 : vector<1x32xf32> to vector<16x32xf32>
    %27 = arith.addf %23, %26 : vector<16x32xf32>
    %28 = math.tanh %27 : vector<16x32xf32>
    %c0_24 = arith.constant 0 : index
    %c0_25 = arith.constant 0 : index
    %29 = vector.load %arg4[%c0_24, %c0_25] : memref<16x32xf32, #tpu.memory_space<vmem>>, vector<16x32xf32>
    tpu.vector_store %arg4[%c0_24, %c0_25], %28 {strides = array<i32>} : memref<16x32xf32, #tpu.memory_space<vmem>>, vector<16x32xf32>,
    %c3 = arith.constant 3 : index
    %c0_26 = arith.constant 0 : index
    %c0_27 = arith.constant 0 : index
    %30 = vector.load %arg2[%c3, %c0_26, %c0_27] : memref<4x32x32xf32, #tpu.memory_space<vmem>>, vector<1x32x32xf32>
    %31 = vector.shape_cast %30 : vector<1x32x32xf32> to vector<32x32xf32>
    %cst_28 = arith.constant dense<0.000000e+00> : vector<16x32xf32>
    %32 = tpu.matmul %28, %31, %cst_28 {dimension_numbers = #tpu.dot_dimension_numbers<[1], [0], [0], [1], [0, 0, 1, 1], [], []>} : vector<16x32xf32>, vector<32x32xf32>, vector<16x32xf32> -> vector<16x32xf32>
    %cst_29 = arith.constant dense<0.000000e+00> : vector<16x32xf32>
    %33 = tpu.matmul %0, %32, %cst_29 {dimension_numbers = #tpu.dot_dimension_numbers<[1], [0], [0], [1], [0, 0, 1, 1], [], []>} : vector<16x16xf32>, vector<16x32xf32>, vector<16x32xf32> -> vector<16x32xf32>
    %c3_30 = arith.constant 3 : index
    %c0_31 = arith.constant 0 : index
    %c0_32 = arith.constant 0 : index
    %34 = vector.load %arg3[%c3_30, %c0_31, %c0_32] : memref<4x1x32xf32, #tpu.memory_space<vmem>>, vector<1x1x32xf32>
    %35 = vector.shape_cast %34 : vector<1x1x32xf32> to vector<1x32xf32>
    %36 = vector.broadcast %35 : vector<1x32xf32> to vector<16x32xf32>
    %37 = arith.addf %33, %36 : vector<16x32xf32>
    %38 = tpu.iota {dimensions = array<i32: 1>} : vector<16x32xi32>
    %c4_i32 = arith.constant 4 : i32
    %39 = vector.broadcast %c4_i32 : i32 to vector<16x32xi32>
    %40 = arith.cmpi slt, %38, %39 : vector<16x32xi32>
    %cst_33 = arith.constant -1.000000e+30 : f32
    %41 = vector.broadcast %cst_33 : f32 to vector<16x32xf32>
    %42 = arith.select %40, %37, %41 : vector<16x32xi1>, vector<16x32xf32>
    %cst_34 = arith.constant dense<0xFF800000> : vector<16xf32>
    %43 = vector.multi_reduction <maximumf>, %42, %cst_34 [1] : vector<16x32xf32> to vector<16xf32>
    %44 = vector.shape_cast %43 : vector<16xf32> to vector<16x1xf32>
    %45 = vector.broadcast %44 : vector<16x1xf32> to vector<16x32xf32>
    %46 = arith.subf %42, %45 : vector<16x32xf32>
    %47 = math.exp %46 : vector<16x32xf32>
    %cst_35 = arith.constant 0.000000e+00 : f32
    %48 = vector.broadcast %cst_35 : f32 to vector<16x32xf32>
    %49 = arith.select %40, %47, %48 : vector<16x32xi1>, vector<16x32xf32>
    %cst_36 = arith.constant dense<0.000000e+00> : vector<16xf32>
    %50 = vector.multi_reduction <add>, %49, %cst_36 [1] : vector<16x32xf32> to vector<16xf32>
    %51 = vector.shape_cast %50 : vector<16xf32> to vector<16x1xf32>
    %52 = math.log %51 : vector<16x1xf32>
    %53 = vector.broadcast %52 : vector<16x1xf32> to vector<16x32xf32>
    %54 = arith.subf %46, %53 : vector<16x32xf32>
    %c0_37 = arith.constant 0 : index
    %c0_38 = arith.constant 0 : index
    %55 = vector.load %arg5[%c0_37, %c0_38] : memref<16x32xf32, #tpu.memory_space<vmem>>, vector<16x32xf32>
    tpu.vector_store %arg5[%c0_37, %c0_38], %54 {strides = array<i32>} : memref<16x32xf32, #tpu.memory_space<vmem>>, vector<16x32xf32>,
    return
  }
}

</mosaic_0001>

<llo_original>
// kernel: net_forward.1
$region0: #{net_forward.1}
  #allocation0 [shape = 'u32[]', space=smem, size = 0x4, offset = 0x4, fixed_abs, tag = 'smem constant byte address 0x4 - core index']
  #allocation1 [shape = 'u32[144,128]{1,0:T(1,128)}', space=vmem, size = 0x12000, scoped, tag = 'internal scratch']
  %s0 = inlined_call_operand.hbm [shape: f32[16,16], index: 0, kind: input, shape index: {}]
  %s1 = inlined_call_operand.hbm [shape: f32[16,32], index: 1, kind: input, shape index: {}]
  %s2 = inlined_call_operand.hbm [shape: f32[4,32,32], index: 2, kind: input, shape index: {}]
  %s3 = inlined_call_operand.vmem [shape: f32[4,1,32], index: 3, kind: input, shape index: {}]
  %s4 = inlined_call_operand.vmem [shape: f32[16,32], index: 4, kind: output, shape index: {0}]
  %s5 = inlined_call_operand.vmem [shape: f32[16,32], index: 5, kind: output, shape index: {1}]
  %6 = xla_tuple %s4, %s5
  %s7 = sld [smem:[#allocation0]]
  $region46: #{net_forward.1} parent=0
    _
  %s9 = ssub.s32 1, %s7
  %s10 = scalar_select 0, %s9, %s7
  $region1: #{net_forward.1} parent=0
    #allocation2 [shape = 'u8[8192]{0}', space=vmem, size = 0x2000, scoped, tag = 'input window, operand 0, single buffered']
    #allocation3 [shape = 's32[1]{0}', space=sflag, size = 0x4, scoped, tag = 'scoped memory for net_forward.1']
    #allocation4 [shape = 'u8[8192]{0}', space=vmem, size = 0x2000, scoped, tag = 'input window, operand 1, single buffered']
    #allocation5 [shape = 's32[1]{0}', space=sflag, size = 0x4, scoped, tag = 'scoped memory for net_forward.1']
    #allocation6 [shape = 'u8[65536]{0}', space=vmem, size = 0x10000, scoped, tag = 'input window, operand 2, single buffered']
    %11 = vsyncpa [#allocation3], 0
    %12 = vsyncpa [#allocation5], 0
    // Predicated region
    $region2: #{net_forward.1} parent=1 // pred_check
      _
    $region3: #{net_forward.1} parent=1 // pred_check_branch
      %14 = sbr.rel (0) target = $region5
    $region4: #{net_forward.1} parent=1 // pred_region
      %s16 = ssub.s32 256, 256
      %17 = vsyncadd [#allocation3], %s16
      %s18 = sshll.u32 [#allocation2], 4
      %s19 = int_to_ptr.vmem [resolvable:$true] %s18
      %24 = dma.hbm_to_vmem [thread:$0]  %s0, 256, %s19, [#allocation3], 128, 128, 8
    $region5: #{net_forward.1} parent=1 // pred_fallthru
      _
    // Predicated region
    $region6: #{net_forward.1} parent=1 // pred_check
      _
    $region7: #{net_forward.1} parent=1 // pred_check_branch
      %26 = sbr.rel (0) target = $region9
    $region8: #{net_forward.1} parent=1 // pred_region
      %s28 = ssub.s32 256, 256
      %29 = vsyncadd [#allocation5], %s28
      %s30 = sshll.u32 [#allocation4], 4
      %s31 = int_to_ptr.vmem [resolvable:$true] %s30
      %36 = dma.hbm_to_vmem [thread:$0]  %s1, 256, %s31, [#allocation5], 128, 128, 8
    $region9: #{net_forward.1} parent=1 // pred_fallthru
      _
    // Predicated region
    $region10: #{net_forward.1} parent=1 // pred_check
      _
    $region11: #{net_forward.1} parent=1 // pred_check_branch
      %38 = sbr.rel (0) target = $region13
    $region12: #{net_forward.1} parent=1 // pred_region
      %s40 = ssub.s32 2048, 2048
      %41 = vsyncadd [#allocation5], %s40
      %s42 = sshll.u32 [#allocation6], 4
      %s43 = int_to_ptr.vmem [resolvable:$true] %s42
      %48 = dma.hbm_to_vmem [thread:$0]  %s2, 2048, %s43, [#allocation5], 128, 128, 8
    $region13: #{net_forward.1} parent=1 // pred_fallthru
      _
    // Predicated region
    $region14: #{net_forward.1} parent=1 // pred_check
      _
    $region15: #{net_forward.1} parent=1 // pred_check_branch
      %50 = sbr.rel (0) target = $region17
    $region16: #{net_forward.1} parent=1 // pred_region
      _
    $region17: #{net_forward.1} parent=1 // pred_fallthru
      _
    // Predicated region
    $region18: #{net_forward.1} parent=1 // pred_check
      _
    $region19: #{net_forward.1} parent=1 // pred_check_branch
      %52 = sbr.rel (0) target = $region21
    $region20: #{net_forward.1} parent=1 // pred_region
      %53 = dma.done [#allocation3], 256
    $region21: #{net_forward.1} parent=1 // pred_fallthru
      _
    // Predicated region
    $region22: #{net_forward.1} parent=1 // pred_check
      _
    $region23: #{net_forward.1} parent=1 // pred_check_branch
      %55 = sbr.rel (0) target = $region25
    $region24: #{net_forward.1} parent=1 // pred_region
      %56 = dma.done [#allocation5], 256
    $region25: #{net_forward.1} parent=1 // pred_fallthru
      _
    // Predicated region
    $region26: #{net_forward.1} parent=1 // pred_check
      _
    $region27: #{net_forward.1} parent=1 // pred_check_branch
      %58 = sbr.rel (0) target = $region29
    $region28: #{net_forward.1} parent=1 // pred_region
      %59 = dma.done [#allocation5], 2048
    $region29: #{net_forward.1} parent=1 // pred_fallthru
      _
    %v60 = vld [vmem:[#allocation2] sm:$0xff]
    %v61 = vld [vmem:[#allocation2 + $0x8] sm:$0xff]
    %v62 = vld [vmem:[#allocation4] sm:$0xff]
    %v63 = vld [vmem:[#allocation4 + $0x8] sm:$0xff]
    %v64 = vld [vmem:[#allocation6] sm:$0xff]
    %v65 = vld [vmem:[#allocation6 + $0x8] sm:$0xff]
    %v66 = vld [vmem:[#allocation6 + $0x10] sm:$0xff]
    %v67 = vld [vmem:[#allocation6 + $0x18] sm:$0xff]
    %vm68 = vcmask 261120
    %v70 = vsel %vm68, %v62, 0
    %v73 = vsel %vm68, %v63, 0
    %75 = vmatprep.subr.mxu0 0.0
    %76 = vmatpush1.msra.mxu0 %v64
    %77 = vmatprep.subr.mxu0 0.0
    %78 = vmatpush1.msra.mxu0 %v65
    %79 = vmatprep.subr.mxu0 0.0
    %80 = vmatpush1.msra.mxu0 %v66
    %81 = vmatprep.subr.mxu0 0.0
    %82 = vmatpush1.msra.mxu0 %v67
    %83 = vmatprep.subr.mxu0 0.0
    %84 = vmatpush1.msra.mxu0 0.0
    %85 = vmatprep.subr.mxu0 0.0
    %86 = vmatpush1.msra.mxu0 0.0
    %87 = vmatprep.subr.mxu0 0.0
    %88 = vmatpush1.msra.mxu0 0.0
    %89 = vmatprep.subr.mxu0 0.0
    %90 = vmatpush1.msra.mxu0 0.0
    %91 = vmatprep.subr.mxu0 0.0
    %92 = vmatpush1.msra.mxu0 0.0
    %93 = vmatprep.subr.mxu0 0.0
    %94 = vmatpush1.msra.mxu0 0.0
    %95 = vmatprep.subr.mxu0 0.0
    %96 = vmatpush1.msra.mxu0 0.0
    %97 = vmatprep.subr.mxu0 0.0
    %98 = vmatpush1.msra.mxu0 0.0
    %99 = vmatprep.subr.mxu0 0.0
    %100 = vmatpush1.msra.mxu0 0.0
    %101 = vmatprep.subr.mxu0 0.0
    %102 = vmatpush1.msra.mxu0 0.0
    %103 = vmatprep.subr.mxu0 0.0
    %104 = vmatpush1.msra.mxu0 0.0
    %105 = vmatprep.subr.mxu0 0.0
    %106 = vmatpush1.msra.mxu0 0.0
    %107 = vmatprep.subr.mxu0 0.0
    %108 = vmatpush1.msra.mxu0 0.0
    %109 = vmatprep.subr.mxu0 0.0
    %110 = vmatpush1.msra.mxu0 0.0
    %111 = vmatprep.subr.mxu0 0.0
    %112 = vmatpush1.msra.mxu0 0.0
    %113 = vmatprep.subr.mxu0 0.0
    %114 = vmatpush1.msra.mxu0 0.0
    %115 = vmatprep.subr.mxu0 0.0
    %116 = vmatpush1.msra.mxu0 0.0
    %117 = vmatprep.subr.mxu0 0.0
    %118 = vmatpush1.msra.mxu0 0.0
    %119 = vmatprep.subr.mxu0 0.0
    %120 = vmatpush1.msra.mxu0 0.0
    %121 = vmatprep.subr.mxu0 0.0
    %122 = vmatpush1.msra.mxu0 0.0
    %123 = vmatprep.subr.mxu0 0.0
    %124 = vmatpush1.msra.mxu0 0.0
    %125 = vmatprep.subr.mxu0 0.0
    %126 = vmatpush1.msra.mxu0 0.0
    %127 = vmatprep.subr.mxu0 0.0
    %128 = vmatpush1.msra.mxu0 0.0
    %129 = vmatprep.subr.mxu0 0.0
    %130 = vmatpush1.msra.mxu0 0.0
    %131 = vmatprep.subr.mxu0 0.0
    %132 = vmatpush1.msra.mxu0 0.0
    %133 = vmatprep.subr.mxu0 0.0
    %134 = vmatpush1.msra.mxu0 0.0
    %135 = vmatprep.subr.mxu0 0.0
    %136 = vmatpush1.msra.mxu0 0.0
    %137 = vmatprep.subr.mxu0 0.0
    %138 = vmatpush1.msra.mxu0 0.0
    %139 = vmatprep.mubr.f32.mxu0 0.0
    %140 = vmatmul.mubr.f32.gmra.mrb[0].mxu0 %v70
    %v141 = vpop.f32.mrb[0].mxu0
    %v142 = vadd.f32 0.0, %v141
    %v143 = vpop.f32.mrb[0].mxu0
    %144 = vmatprep.mubr.f32.mxu0 0.0
    %145 = vmatmul.mubr.f32.gmra.mrb[0].mxu0 %v73
    %v146 = vpop.f32.mrb[0].mxu0
    %v147 = vadd.f32 0.0, %v146
    %v148 = vpop.f32.mrb[0].mxu0
    %149 = vdwg.mxu0
    %v150 = vld [vmem:[%s3] sm:$0x1]
    %v152 = vlaneseq
    %v153 = vshrl.u32 %v152, 7
    %v154 = vsub.s32 0, %v153
    %v155 = vrot.slane %v150, %v154
    %vm157 = vcmask 130048
    %v159 = vsel %vm157, %v60, 0
    %v162 = vsel %vm157, %v61, 0
    %164 = vmatprep.subr.mxu0 0.0
    %165 = vmatpush1.msra.mxu0 %v142
    %166 = vmatprep.subr.mxu0 0.0
    %167 = vmatpush1.msra.mxu0 %v147
    %168 = vmatprep.subr.mxu0 0.0
    %169 = vmatpush1.msra.mxu0 0.0
    %170 = vmatprep.subr.mxu0 0.0
    %171 = vmatpush1.msra.mxu0 0.0
    %172 = vmatprep.subr.mxu0 0.0
    %173 = vmatpush1.msra.mxu0 0.0
    %174 = vmatprep.subr.mxu0 0.0
    %175 = vmatpush1.msra.mxu0 0.0
    %176 = vmatprep.subr.mxu0 0.0
    %177 = vmatpush1.msra.mxu0 0.0
    %178 = vmatprep.subr.mxu0 0.0
    %179 = vmatpush1.msra.mxu0 0.0
    %180 = vmatprep.subr.mxu0 0.0
    %181 = vmatpush1.msra.mxu0 0.0
    %182 = vmatprep.subr.mxu0 0.0
    %183 = vmatpush1.msra.mxu0 0.0
    %184 = vmatprep.subr.mxu0 0.0
    %185 = vmatpush1.msra.mxu0 0.0
    %186 = vmatprep.subr.mxu0 0.0
    %187 = vmatpush1.msra.mxu0 0.0
    %188 = vmatprep.subr.mxu0 0.0
    %189 = vmatpush1.msra.mxu0 0.0
    %190 = vmatprep.subr.mxu0 0.0
    %191 = vmatpush1.msra.mxu0 0.0
    %192 = vmatprep.subr.mxu0 0.0
    %193 = vmatpush1.msra.mxu0 0.0
    %194 = vmatprep.subr.mxu0 0.0
    %195 = vmatpush1.msra.mxu0 0.0
    %196 = vmatprep.subr.mxu0 0.0
    %197 = vmatpush1.msra.mxu0 0.0
    %198 = vmatprep.subr.mxu0 0.0
    %199 = vmatpush1.msra.mxu0 0.0
    %200 = vmatprep.subr.mxu0 0.0
    %201 = vmatpush1.msra.mxu0 0.0
    %202 = vmatprep.subr.mxu0 0.0
    %203 = vmatpush1.msra.mxu0 0.0
    %204 = vmatprep.subr.mxu0 0.0
    %205 = vmatpush1.msra.mxu0 0.0
    %206 = vmatprep.subr.mxu0 0.0
    %207 = vmatpush1.msra.mxu0 0.0
    %208 = vmatprep.subr.mxu0 0.0
    %209 = vmatpush1.msra.mxu0 0.0
    %210 = vmatprep.subr.mxu0 0.0
    %211 = vmatpush1.msra.mxu0 0.0
    %212 = vmatprep.subr.mxu0 0.0
    %213 = vmatpush1.msra.mxu0 0.0
    %214 = vmatprep.subr.mxu0 0.0
    %215 = vmatpush1.msra.mxu0 0.0
    %216 = vmatprep.subr.mxu0 0.0
    %217 = vmatpush1.msra.mxu0 0.0
    %218 = vmatprep.subr.mxu0 0.0
    %219 = vmatpush1.msra.mxu0 0.0
    %220 = vmatprep.subr.mxu0 0.0
    %221 = vmatpush1.msra.mxu0 0.0
    %222 = vmatprep.subr.mxu0 0.0
    %223 = vmatpush1.msra.mxu0 0.0
    %224 = vmatprep.subr.mxu0 0.0
    %225 = vmatpush1.msra.mxu0 0.0
    %226 = vmatprep.subr.mxu0 0.0
    %227 = vmatpush1.msra.mxu0 0.0
    %228 = vmatprep.mubr.f32.mxu0 0.0
    %229 = vmatmul.mubr.f32.gmra.mrb[0].mxu0 %v159
    %v230 = vpop.f32.mrb[0].mxu0
    %v231 = vadd.f32 %v155, %v230
    %v232 = vpop.f32.mrb[0].mxu0
    %233 = vmatprep.mubr.f32.mxu0 0.0
    %234 = vmatmul.mubr.f32.gmra.mrb[0].mxu0 %v162
    %v235 = vpop.f32.mrb[0].mxu0
    %v236 = vadd.f32 %v155, %v235
    %v237 = vpop.f32.mrb[0].mxu0
    %238 = vdwg.mxu0
    %v239 = vtanh.pop %v231
    %v240 = vtanh.pop %v236
    %s241 = scalar_lea.vmem [#allocation6], 32
    %v242 = vld [vmem:[%s241] sm:$0xff]
    %v243 = vld [vmem:[%s241 + $0x8] sm:$0xff]
    %v244 = vld [vmem:[%s241 + $0x10] sm:$0xff]
    %v245 = vld [vmem:[%s241 + $0x18] sm:$0xff]
    %v247 = vsel %vm68, %v239, 0
    %v250 = vsel %vm68, %v240, 0
    %252 = vmatprep.subr.mxu0 0.0
    %253 = vmatpush1.msra.mxu0 %v242
    %254 = vmatprep.subr.mxu0 0.0
    %255 = vmatpush1.msra.mxu0 %v243
    %256 = vmatprep.subr.mxu0 0.0
    %257 = vmatpush1.msra.mxu0 %v244
    %258 = vmatprep.subr.mxu0 0.0
    %259 = vmatpush1.msra.mxu0 %v245
    %260 = vmatprep.subr.mxu0 0.0
    %261 = vmatpush1.msra.mxu0 0.0
    %262 = vmatprep.subr.mxu0 0.0
    %263 = vmatpush1.msra.mxu0 0.0
    %264 = vmatprep.subr.mxu0 0.0
    %265 = vmatpush1.msra.mxu0 0.0
    %266 = vmatprep.subr.mxu0 0.0
    %267 = vmatpush1.msra.mxu0 0.0
    %268 = vmatprep.subr.mxu0 0.0
    %269 = vmatpush1.msra.mxu0 0.0
    %270 = vmatprep.subr.mxu0 0.0
    %271 = vmatpush1.msra.mxu0 0.0
    %272 = vmatprep.subr.mxu0 0.0
    %273 = vmatpush1.msra.mxu0 0.0
    %274 = vmatprep.subr.mxu0 0.0
    %275 = vmatpush1.msra.mxu0 0.0
    %276 = vmatprep.subr.mxu0 0.0
    %277 = vmatpush1.msra.mxu0 0.0
    %278 = vmatprep.subr.mxu0 0.0
    %279 = vmatpush1.msra.mxu0 0.0
    %280 = vmatprep.subr.mxu0 0.0
    %281 = vmatpush1.msra.mxu0 0.0
    %282 = vmatprep.subr.mxu0 0.0
    %283 = vmatpush1.msra.mxu0 0.0
    %284 = vmatprep.subr.mxu0 0.0
    %285 = vmatpush1.msra.mxu0 0.0
    %286 = vmatprep.subr.mxu0 0.0
    %287 = vmatpush1.msra.mxu0 0.0
    %288 = vmatprep.subr.mxu0 0.0
    %289 = vmatpush1.msra.mxu0 0.0
    %290 = vmatprep.subr.mxu0 0.0
    %291 = vmatpush1.msra.mxu0 0.0
    %292 = vmatprep.subr.mxu0 0.0
    %293 = vmatpush1.msra.mxu0 0.0
    %294 = vmatprep.subr.mxu0 0.0
    %295 = vmatpush1.msra.mxu0 0.0
    %296 = vmatprep.subr.mxu0 0.0
    %297 = vmatpush1.msra.mxu0 0.0
    %298 = vmatprep.subr.mxu0 0.0
    %299 = vmatpush1.msra.mxu0 0.0
    %300 = vmatprep.subr.mxu0 0.0
    %301 = vmatpush1.msra.mxu0 0.0
    %302 = vmatprep.subr.mxu0 0.0
    %303 = vmatpush1.msra.mxu0 0.0
    %304 = vmatprep.subr.mxu0 0.0
    %305 = vmatpush1.msra.mxu0 0.0
    %306 = vmatprep.subr.mxu0 0.0
    %307 = vmatpush1.msra.mxu0 0.0
    %308 = vmatprep.subr.mxu0 0.0
    %309 = vmatpush1.msra.mxu0 0.0
    %310 = vmatprep.subr.mxu0 0.0
    %311 = vmatpush1.msra.mxu0 0.0
    %312 = vmatprep.subr.mxu0 0.0
    %313 = vmatpush1.msra.mxu0 0.0
    %314 = vmatprep.subr.mxu0 0.0
    %315 = vmatpush1.msra.mxu0 0.0
    %316 = vmatprep.mubr.f32.mxu0 0.0
    %317 = vmatmul.mubr.f32.gmra.mrb[0].mxu0 %v247
    %v318 = vpop.f32.mrb[0].mxu0
    %v319 = vadd.f32 0.0, %v318
    %v320 = vpop.f32.mrb[0].mxu0
    %321 = vmatprep.mubr.f32.mxu0 0.0
    %322 = vmatmul.mubr.f32.gmra.mrb[0].mxu0 %v250
    %v323 = vpop.f32.mrb[0].mxu0
    %v324 = vadd.f32 0.0, %v323
    %v325 = vpop.f32.mrb[0].mxu0
    %326 = vdwg.mxu0
    %s327 = scalar_lea.vmem %s3, 1
    %v328 = vld [vmem:[%s327] sm:$0x1]
    %v330 = vlaneseq
    %v331 = vshrl.u32 %v330, 7
    %v332 = vsub.s32 0, %v331
    %v333 = vrot.slane %v328, %v332
    %335 = vmatprep.subr.mxu0 0.0
    %336 = vmatpush1.msra.mxu0 %v319
    %337 = vmatprep.subr.mxu0 0.0
    %338 = vmatpush1.msra.mxu0 %v324
    %339 = vmatprep.subr.mxu0 0.0
    %340 = vmatpush1.msra.mxu0 0.0
    %341 = vmatprep.subr.mxu0 0.0
    %342 = vmatpush1.msra.mxu0 0.0
    %343 = vmatprep.subr.mxu0 0.0
    %344 = vmatpush1.msra.mxu0 0.0
    %345 = vmatprep.subr.mxu0 0.0
    %346 = vmatpush1.msra.mxu0 0.0
    %347 = vmatprep.subr.mxu0 0.0
    %348 = vmatpush1.msra.mxu0 0.0
    %349 = vmatprep.subr.mxu0 0.0
    %350 = vmatpush1.msra.mxu0 0.0
    %351 = vmatprep.subr.mxu0 0.0
    %352 = vmatpush1.msra.mxu0 0.0
    %353 = vmatprep.subr.mxu0 0.0
    %354 = vmatpush1.msra.mxu0 0.0
    %355 = vmatprep.subr.mxu0 0.0
    %356 = vmatpush1.msra.mxu0 0.0
    %357 = vmatprep.subr.mxu0 0.0
    %358 = vmatpush1.msra.mxu0 0.0
    %359 = vmatprep.subr.mxu0 0.0
    %360 = vmatpush1.msra.mxu0 0.0
    %361 = vmatprep.subr.mxu0 0.0
    %362 = vmatpush1.msra.mxu0 0.0
    %363 = vmatprep.subr.mxu0 0.0
    %364 = vmatpush1.msra.mxu0 0.0
    %365 = vmatprep.subr.mxu0 0.0
    %366 = vmatpush1.msra.mxu0 0.0
    %367 = vmatprep.subr.mxu0 0.0
    %368 = vmatpush1.msra.mxu0 0.0
    %369 = vmatprep.subr.mxu0 0.0
    %370 = vmatpush1.msra.mxu0 0.0
    %371 = vmatprep.subr.mxu0 0.0
    %372 = vmatpush1.msra.mxu0 0.0
    %373 = vmatprep.subr.mxu0 0.0
    %374 = vmatpush1.msra.mxu0 0.0
    %375 = vmatprep.subr.mxu0 0.0
    %376 = vmatpush1.msra.mxu0 0.0
    %377 = vmatprep.subr.mxu0 0.0
    %378 = vmatpush1.msra.mxu0 0.0
    %379 = vmatprep.subr.mxu0 0.0
    %380 = vmatpush1.msra.mxu0 0.0
    %381 = vmatprep.subr.mxu0 0.0
    %382 = vmatpush1.msra.mxu0 0.0
    %383 = vmatprep.subr.mxu0 0.0
    %384 = vmatpush1.msra.mxu0 0.0
    %385 = vmatprep.subr.mxu0 0.0
    %386 = vmatpush1.msra.mxu0 0.0
    %387 = vmatprep.subr.mxu0 0.0
    %388 = vmatpush1.msra.mxu0 0.0
    %389 = vmatprep.subr.mxu0 0.0
    %390 = vmatpush1.msra.mxu0 0.0
    %391 = vmatprep.subr.mxu0 0.0
    %392 = vmatpush1.msra.mxu0 0.0
    %393 = vmatprep.subr.mxu0 0.0
    %394 = vmatpush1.msra.mxu0 0.0
    %395 = vmatprep.subr.mxu0 0.0
    %396 = vmatpush1.msra.mxu0 0.0
    %397 = vmatprep.subr.mxu0 0.0
    %398 = vmatpush1.msra.mxu0 0.0
    %399 = vmatprep.mubr.f32.mxu0 0.0
    %400 = vmatmul.mubr.f32.gmra.mrb[0].mxu0 %v159
    %v401 = vpop.f32.mrb[0].mxu0
    %v402 = vadd.f32 %v333, %v401
    %v403 = vpop.f32.mrb[0].mxu0
    %404 = vmatprep.mubr.f32.mxu0 0.0
    %405 = vmatmul.mubr.f32.gmra.mrb[0].mxu0 %v162
    %v406 = vpop.f32.mrb[0].mxu0
    %v407 = vadd.f32 %v333, %v406
    %v408 = vpop.f32.mrb[0].mxu0
    %409 = vdwg.mxu0
    %v410 = vtanh.pop %v402
    %v411 = vtanh.pop %v407
    %s412 = scalar_lea.vmem [#allocation6], 64
    %v413 = vld [vmem:[%s412] sm:$0xff]
    %v414 = vld [vmem:[%s412 + $0x8] sm:$0xff]
    %v415 = vld [vmem:[%s412 + $0x10] sm:$0xff]
    %v416 = vld [vmem:[%s412 + $0x18] sm:$0xff]
    %v418 = vsel %vm68, %v410, 0
    %v421 = vsel %vm68, %v411, 0
    %423 = vmatprep.subr.mxu0 0.0
    %424 = vmatpush1.msra.mxu0 %v413
    %425 = vmatprep.subr.mxu0 0.0
    %426 = vmatpush1.msra.mxu0 %v414
    %427 = vmatprep.subr.mxu0 0.0
    %428 = vmatpush1.msra.mxu0 %v415
    %429 = vmatprep.subr.mxu0 0.0
    %430 = vmatpush1.msra.mxu0 %v416
    %431 = vmatprep.subr.mxu0 0.0
    %432 = vmatpush1.msra.mxu0 0.0
    %433 = vmatprep.subr.mxu0 0.0
    %434 = vmatpush1.msra.mxu0 0.0
    %435 = vmatprep.subr.mxu0 0.0
    %436 = vmatpush1.msra.mxu0 0.0
    %437 = vmatprep.subr.mxu0 0.0
    %438 = vmatpush1.msra.mxu0 0.0
    %439 = vmatprep.subr.mxu0 0.0
    %440 = vmatpush1.msra.mxu0 0.0
    %441 = vmatprep.subr.mxu0 0.0
    %442 = vmatpush1.msra.mxu0 0.0
    %443 = vmatprep.subr.mxu0 0.0
    %444 = vmatpush1.msra.mxu0 0.0
    %445 = vmatprep.subr.mxu0 0.0
    %446 = vmatpush1.msra.mxu0 0.0
    %447 = vmatprep.subr.mxu0 0.0
    %448 = vmatpush1.msra.mxu0 0.0
    %449 = vmatprep.subr.mxu0 0.0
    %450 = vmatpush1.msra.mxu0 0.0
    %451 = vmatprep.subr.mxu0 0.0
    %452 = vmatpush1.msra.mxu0 0.0
    %453 = vmatprep.subr.mxu0 0.0
    %454 = vmatpush1.msra.mxu0 0.0
    %455 = vmatprep.subr.mxu0 0.0
    %456 = vmatpush1.msra.mxu0 0.0
    %457 = vmatprep.subr.mxu0 0.0
    %458 = vmatpush1.msra.mxu0 0.0
    %459 = vmatprep.subr.mxu0 0.0
    %460 = vmatpush1.msra.mxu0 0.0
    %461 = vmatprep.subr.mxu0 0.0
    %462 = vmatpush1.msra.mxu0 0.0
    %463 = vmatprep.subr.mxu0 0.0
    %464 = vmatpush1.msra.mxu0 0.0
    %465 = vmatprep.subr.mxu0 0.0
    %466 = vmatpush1.msra.mxu0 0.0
    %467 = vmatprep.subr.mxu0 0.0
    %468 = vmatpush1.msra.mxu0 0.0
    %469 = vmatprep.subr.mxu0 0.0
    %470 = vmatpush1.msra.mxu0 0.0
    %471 = vmatprep.subr.mxu0 0.0
    %472 = vmatpush1.msra.mxu0 0.0
    %473 = vmatprep.subr.mxu0 0.0
    %474 = vmatpush1.msra.mxu0 0.0
    %475 = vmatprep.subr.mxu0 0.0
    %476 = vmatpush1.msra.mxu0 0.0
    %477 = vmatprep.subr.mxu0 0.0
    %478 = vmatpush1.msra.mxu0 0.0
    %479 = vmatprep.subr.mxu0 0.0
    %480 = vmatpush1.msra.mxu0 0.0
    %481 = vmatprep.subr.mxu0 0.0
    %482 = vmatpush1.msra.mxu0 0.0
    %483 = vmatprep.subr.mxu0 0.0
    %484 = vmatpush1.msra.mxu0 0.0
    %485 = vmatprep.subr.mxu0 0.0
    %486 = vmatpush1.msra.mxu0 0.0
    %487 = vmatprep.mubr.f32.mxu0 0.0
    %488 = vmatmul.mubr.f32.gmra.mrb[0].mxu0 %v418
    %v489 = vpop.f32.mrb[0].mxu0
    %v490 = vadd.f32 0.0, %v489
    %v491 = vpop.f32.mrb[0].mxu0
    %492 = vmatprep.mubr.f32.mxu0 0.0
    %493 = vmatmul.mubr.f32.gmra.mrb[0].mxu0 %v421
    %v494 = vpop.f32.mrb[0].mxu0
    %v495 = vadd.f32 0.0, %v494
    %v496 = vpop.f32.mrb[0].mxu0
    %497 = vdwg.mxu0
    %s498 = scalar_lea.vmem %s3, 2
    %v499 = vld [vmem:[%s498] sm:$0x1]
    %v501 = vlaneseq
    %v502 = vshrl.u32 %v501, 7
    %v503 = vsub.s32 0, %v502
    %v504 = vrot.slane %v499, %v503
    %506 = vmatprep.subr.mxu0 0.0
    %507 = vmatpush1.msra.mxu0 %v490
    %508 = vmatprep.subr.mxu0 0.0
    %509 = vmatpush1.msra.mxu0 %v495
    %510 = vmatprep.subr.mxu0 0.0
    %511 = vmatpush1.msra.mxu0 0.0
    %512 = vmatprep.subr.mxu0 0.0
    %513 = vmatpush1.msra.mxu0 0.0
    %514 = vmatprep.subr.mxu0 0.0
    %515 = vmatpush1.msra.mxu0 0.0
    %516 = vmatprep.subr.mxu0 0.0
    %517 = vmatpush1.msra.mxu0 0.0
    %518 = vmatprep.subr.mxu0 0.0
    %519 = vmatpush1.msra.mxu0 0.0
    %520 = vmatprep.subr.mxu0 0.0
    %521 = vmatpush1.msra.mxu0 0.0
    %522 = vmatprep.subr.mxu0 0.0
    %523 = vmatpush1.msra.mxu0 0.0
    %524 = vmatprep.subr.mxu0 0.0
    %525 = vmatpush1.msra.mxu0 0.0
    %526 = vmatprep.subr.mxu0 0.0
    %527 = vmatpush1.msra.mxu0 0.0
    %528 = vmatprep.subr.mxu0 0.0
    %529 = vmatpush1.msra.mxu0 0.0
    %530 = vmatprep.subr.mxu0 0.0
    %531 = vmatpush1.msra.mxu0 0.0
    %532 = vmatprep.subr.mxu0 0.0
    %533 = vmatpush1.msra.mxu0 0.0
    %534 = vmatprep.subr.mxu0 0.0
    %535 = vmatpush1.msra.mxu0 0.0
    %536 = vmatprep.subr.mxu0 0.0
    %537 = vmatpush1.msra.mxu0 0.0
    %538 = vmatprep.subr.mxu0 0.0
    %539 = vmatpush1.msra.mxu0 0.0
    %540 = vmatprep.subr.mxu0 0.0
    %541 = vmatpush1.msra.mxu0 0.0
    %542 = vmatprep.subr.mxu0 0.0
    %543 = vmatpush1.msra.mxu0 0.0
    %544 = vmatprep.subr.mxu0 0.0
    %545 = vmatpush1.msra.mxu0 0.0
    %546 = vmatprep.subr.mxu0 0.0
    %547 = vmatpush1.msra.mxu0 0.0
    %548 = vmatprep.subr.mxu0 0.0
    %549 = vmatpush1.msra.mxu0 0.0
    %550 = vmatprep.subr.mxu0 0.0
    %551 = vmatpush1.msra.mxu0 0.0
    %552 = vmatprep.subr.mxu0 0.0
    %553 = vmatpush1.msra.mxu0 0.0
    %554 = vmatprep.subr.mxu0 0.0
    %555 = vmatpush1.msra.mxu0 0.0
    %556 = vmatprep.subr.mxu0 0.0
    %557 = vmatpush1.msra.mxu0 0.0
    %558 = vmatprep.subr.mxu0 0.0
    %559 = vmatpush1.msra.mxu0 0.0
    %560 = vmatprep.subr.mxu0 0.0
    %561 = vmatpush1.msra.mxu0 0.0
    %562 = vmatprep.subr.mxu0 0.0
    %563 = vmatpush1.msra.mxu0 0.0
    %564 = vmatprep.subr.mxu0 0.0
    %565 = vmatpush1.msra.mxu0 0.0
    %566 = vmatprep.subr.mxu0 0.0
    %567 = vmatpush1.msra.mxu0 0.0
    %568 = vmatprep.subr.mxu0 0.0
    %569 = vmatpush1.msra.mxu0 0.0
    %570 = vmatprep.mubr.f32.mxu0 0.0
    %571 = vmatmul.mubr.f32.gmra.mrb[0].mxu0 %v159
    %v572 = vpop.f32.mrb[0].mxu0
    %v573 = vadd.f32 %v504, %v572
    %v574 = vpop.f32.mrb[0].mxu0
    %575 = vmatprep.mubr.f32.mxu0 0.0
    %576 = vmatmul.mubr.f32.gmra.mrb[0].mxu0 %v162
    %v577 = vpop.f32.mrb[0].mxu0
    %v578 = vadd.f32 %v504, %v577
    %v579 = vpop.f32.mrb[0].mxu0
    %580 = vdwg.mxu0
    %v581 = vtanh.pop %v573
    %v582 = vtanh.pop %v578
    %583 = vst.msk [vmem:[%s4] sm:$0xff] %vm68, %v581
    %584 = vst.msk [vmem:[%s4 + $0x8] sm:$0xff] %vm68, %v582
    %s585 = scalar_lea.vmem [#allocation6], 96
    %v586 = vld [vmem:[%s585] sm:$0xff]
    %v587 = vld [vmem:[%s585 + $0x8] sm:$0xff]
    %v588 = vld [vmem:[%s585 + $0x10] sm:$0xff]
    %v589 = vld [vmem:[%s585 + $0x18] sm:$0xff]
    %v591 = vsel %vm68, %v581, 0
    %v594 = vsel %vm68, %v582, 0
    %596 = vmatprep.subr.mxu0 0.0
    %597 = vmatpush1.msra.mxu0 %v586
    %598 = vmatprep.subr.mxu0 0.0
    %599 = vmatpush1.msra.mxu0 %v587
    %600 = vmatprep.subr.mxu0 0.0
    %601 = vmatpush1.msra.mxu0 %v588
    %602 = vmatprep.subr.mxu0 0.0
    %603 = vmatpush1.msra.mxu0 %v589
    %604 = vmatprep.subr.mxu0 0.0
    %605 = vmatpush1.msra.mxu0 0.0
    %606 = vmatprep.subr.mxu0 0.0
    %607 = vmatpush1.msra.mxu0 0.0
    %608 = vmatprep.subr.mxu0 0.0
    %609 = vmatpush1.msra.mxu0 0.0
    %610 = vmatprep.subr.mxu0 0.0
    %611 = vmatpush1.msra.mxu0 0.0
    %612 = vmatprep.subr.mxu0 0.0
    %613 = vmatpush1.msra.mxu0 0.0
    %614 = vmatprep.subr.mxu0 0.0
    %615 = vmatpush1.msra.mxu0 0.0
    %616 = vmatprep.subr.mxu0 0.0
    %617 = vmatpush1.msra.mxu0 0.0
    %618 = vmatprep.subr.mxu0 0.0
    %619 = vmatpush1.msra.mxu0 0.0
    %620 = vmatprep.subr.mxu0 0.0
    %621 = vmatpush1.msra.mxu0 0.0
    %622 = vmatprep.subr.mxu0 0.0
    %623 = vmatpush1.msra.mxu0 0.0
    %624 = vmatprep.subr.mxu0 0.0
    %625 = vmatpush1.msra.mxu0 0.0
    %626 = vmatprep.subr.mxu0 0.0
    %627 = vmatpush1.msra.mxu0 0.0
    %628 = vmatprep.subr.mxu0 0.0
    %629 = vmatpush1.msra.mxu0 0.0
    %630 = vmatprep.subr.mxu0 0.0
    %631 = vmatpush1.msra.mxu0 0.0
    %632 = vmatprep.subr.mxu0 0.0
    %633 = vmatpush1.msra.mxu0 0.0
    %634 = vmatprep.subr.mxu0 0.0
    %635 = vmatpush1.msra.mxu0 0.0
    %636 = vmatprep.subr.mxu0 0.0
    %637 = vmatpush1.msra.mxu0 0.0
    %638 = vmatprep.subr.mxu0 0.0
    %639 = vmatpush1.msra.mxu0 0.0
    %640 = vmatprep.subr.mxu0 0.0
    %641 = vmatpush1.msra.mxu0 0.0
    %642 = vmatprep.subr.mxu0 0.0
    %643 = vmatpush1.msra.mxu0 0.0
    %644 = vmatprep.subr.mxu0 0.0
    %645 = vmatpush1.msra.mxu0 0.0
    %646 = vmatprep.subr.mxu0 0.0
    %647 = vmatpush1.msra.mxu0 0.0
    %648 = vmatprep.subr.mxu0 0.0
    %649 = vmatpush1.msra.mxu0 0.0
    %650 = vmatprep.subr.mxu0 0.0
    %651 = vmatpush1.msra.mxu0 0.0
    %652 = vmatprep.subr.mxu0 0.0
    %653 = vmatpush1.msra.mxu0 0.0
    %654 = vmatprep.subr.mxu0 0.0
    %655 = vmatpush1.msra.mxu0 0.0
    %656 = vmatprep.subr.mxu0 0.0
    %657 = vmatpush1.msra.mxu0 0.0
    %658 = vmatprep.subr.mxu0 0.0
    %659 = vmatpush1.msra.mxu0 0.0
    %660 = vmatprep.mubr.f32.mxu0 0.0
    %661 = vmatmul.mubr.f32.gmra.mrb[0].mxu0 %v591
    %v662 = vpop.f32.mrb[0].mxu0
    %v663 = vadd.f32 0.0, %v662
    %v664 = vpop.f32.mrb[0].mxu0
    %665 = vmatprep.mubr.f32.mxu0 0.0
    %666 = vmatmul.mubr.f32.gmra.mrb[0].mxu0 %v594
    %v667 = vpop.f32.mrb[0].mxu0
    %v668 = vadd.f32 0.0, %v667
    %v669 = vpop.f32.mrb[0].mxu0
    %670 = vdwg.mxu0
    %s671 = scalar_lea.vmem %s3, 3
    %v672 = vld [vmem:[%s671] sm:$0x1]
    %v674 = vlaneseq
    %v675 = vshrl.u32 %v674, 7
    %v676 = vsub.s32 0, %v675
    %v677 = vrot.slane %v672, %v676
    %679 = vmatprep.subr.mxu0 0.0
    %680 = vmatpush1.msra.mxu0 %v663
    %681 = vmatprep.subr.mxu0 0.0
    %682 = vmatpush1.msra.mxu0 %v668
    %683 = vmatprep.subr.mxu0 0.0
    %684 = vmatpush1.msra.mxu0 0.0
    %685 = vmatprep.subr.mxu0 0.0
    %686 = vmatpush1.msra.mxu0 0.0
    %687 = vmatprep.subr.mxu0 0.0
    %688 = vmatpush1.msra.mxu0 0.0
    %689 = vmatprep.subr.mxu0 0.0
    %690 = vmatpush1.msra.mxu0 0.0
    %691 = vmatprep.subr.mxu0 0.0
    %692 = vmatpush1.msra.mxu0 0.0
    %693 = vmatprep.subr.mxu0 0.0
    %694 = vmatpush1.msra.mxu0 0.0
    %695 = vmatprep.subr.mxu0 0.0
    %696 = vmatpush1.msra.mxu0 0.0
    %697 = vmatprep.subr.mxu0 0.0
    %698 = vmatpush1.msra.mxu0 0.0
    %699 = vmatprep.subr.mxu0 0.0
    %700 = vmatpush1.msra.mxu0 0.0
    %701 = vmatprep.subr.mxu0 0.0
    %702 = vmatpush1.msra.mxu0 0.0
    %703 = vmatprep.subr.mxu0 0.0
    %704 = vmatpush1.msra.mxu0 0.0
    %705 = vmatprep.subr.mxu0 0.0
    %706 = vmatpush1.msra.mxu0 0.0
    %707 = vmatprep.subr.mxu0 0.0
    %708 = vmatpush1.msra.mxu0 0.0
    %709 = vmatprep.subr.mxu0 0.0
    %710 = vmatpush1.msra.mxu0 0.0
    %711 = vmatprep.subr.mxu0 0.0
    %712 = vmatpush1.msra.mxu0 0.0
    %713 = vmatprep.subr.mxu0 0.0
    %714 = vmatpush1.msra.mxu0 0.0
    %715 = vmatprep.subr.mxu0 0.0
    %716 = vmatpush1.msra.mxu0 0.0
    %717 = vmatprep.subr.mxu0 0.0
    %718 = vmatpush1.msra.mxu0 0.0
    %719 = vmatprep.subr.mxu0 0.0
    %720 = vmatpush1.msra.mxu0 0.0
    %721 = vmatprep.subr.mxu0 0.0
    %722 = vmatpush1.msra.mxu0 0.0
    %723 = vmatprep.subr.mxu0 0.0
    %724 = vmatpush1.msra.mxu0 0.0
    %725 = vmatprep.subr.mxu0 0.0
    %726 = vmatpush1.msra.mxu0 0.0
    %727 = vmatprep.subr.mxu0 0.0
    %728 = vmatpush1.msra.mxu0 0.0
    %729 = vmatprep.subr.mxu0 0.0
    %730 = vmatpush1.msra.mxu0 0.0
    %731 = vmatprep.subr.mxu0 0.0
    %732 = vmatpush1.msra.mxu0 0.0
    %733 = vmatprep.subr.mxu0 0.0
    %734 = vmatpush1.msra.mxu0 0.0
    %735 = vmatprep.subr.mxu0 0.0
    %736 = vmatpush1.msra.mxu0 0.0
    %737 = vmatprep.subr.mxu0 0.0
    %738 = vmatpush1.msra.mxu0 0.0
    %739 = vmatprep.subr.mxu0 0.0
    %740 = vmatpush1.msra.mxu0 0.0
    %741 = vmatprep.subr.mxu0 0.0
    %742 = vmatpush1.msra.mxu0 0.0
    %743 = vmatprep.mubr.f32.mxu0 0.0
    %744 = vmatmul.mubr.f32.gmra.mrb[0].mxu0 %v159
    %v745 = vpop.f32.mrb[0].mxu0
    %v746 = vadd.f32 %v677, %v745
    %v747 = vpop.f32.mrb[0].mxu0
    %748 = vmatprep.mubr.f32.mxu0 0.0
    %749 = vmatmul.mubr.f32.gmra.mrb[0].mxu0 %v162
    %v750 = vpop.f32.mrb[0].mxu0
    %v751 = vadd.f32 %v677, %v750
    %v752 = vpop.f32.mrb[0].mxu0
    %753 = vdwg.mxu0
    %v754 = vlaneseq
    %v755 = vand.u32 %v754, 127
    %vm756 = vcmp.lt.s32.totalorder %v755, 4
    %v757 = vsel %vm756, %v746, -1e+30
    %v758 = vsel %vm756, %v751, -1e+30
    %v759 = vsel %vm68, %v757, -inf
    %760 = vmax.xlane.f32.xlu0 %v759
    %v761 = vpop.xlane.xlu0 %760
    %v762 = vsel %vm68, %v758, -inf
    %763 = vmax.xlane.f32.xlu0 %v762
    %v764 = vpop.xlane.xlu0 %763
    %v765 = vsub.f32 %v757, %v761
    %v766 = vsub.f32 %v758, %v764
    %v767 = vmul.f32 %v765, 1.442695
    %v768 = vpow.pop %v767
    %v769 = vmul.f32 %v766, 1.442695
    %v770 = vpow.pop %v769
    %v771 = vsel %vm756, %v768, 0.0
    %v772 = vsel %vm756, %v770, 0.0
    %v773 = vsel %vm68, %v771, 0.0
    %774 = vadd.xlane.f32.xlu0 %v773
    %v775 = vpop.xlane.xlu0 %774
    %v776 = vsel %vm68, %v772, 0.0
    %777 = vadd.xlane.f32.xlu0 %v776
    %v778 = vpop.xlane.xlu0 %777
    %v779 = vlog2.pop %v775
    %v780 = vmul.f32 %v779, 0.6931472
    %v781 = vlog2.pop %v778
    %v782 = vmul.f32 %v781, 0.6931472
    %v783 = vsub.f32 %v765, %v780
    %v784 = vsub.f32 %v766, %v782
    %785 = vst.msk [vmem:[%s5] sm:$0xff] %vm68, %v783
    %786 = vst.msk [vmem:[%s5 + $0x8] sm:$0xff] %vm68, %v784
    // Predicated region
    $region30: #{net_forward.1} parent=1 // pred_check
      _
    $region31: #{net_forward.1} parent=1 // pred_check_branch
      %788 = sbr.rel (0) target = $region33
    $region32: #{net_forward.1} parent=1 // pred_region
      _
    $region33: #{net_forward.1} parent=1 // pred_fallthru
      _
    // Predicated region
    $region34: #{net_forward.1} parent=1 // pred_check
      _
    $region35: #{net_forward.1} parent=1 // pred_check_branch
      %790 = sbr.rel (0) target = $region37
    $region36: #{net_forward.1} parent=1 // pred_region
      _
    $region37: #{net_forward.1} parent=1 // pred_fallthru
      _
    // Predicated region
    $region38: #{net_forward.1} parent=1 // pred_check
      _
    $region39: #{net_forward.1} parent=1 // pred_check_branch
      %792 = sbr.rel (0) target = $region41
    $region40: #{net_forward.1} parent=1 // pred_region
      _
    $region41: #{net_forward.1} parent=1 // pred_fallthru
      _
    // Predicated region
    $region42: #{net_forward.1} parent=1 // pred_check
      _
    $region43: #{net_forward.1} parent=1 // pred_check_branch
      %794 = sbr.rel (0) target = $region45
    $region44: #{net_forward.1} parent=1 // pred_region
      _
    $region45: #{net_forward.1} parent=1 // pred_fallthru
      _
    %795 = vsyncpa [#allocation3], 1
    %796 = vsyncpa [#allocation5], 1

</llo_original>
